<compile_context>
chip_gen: v5e
topology: v5e:2x2
jax: 0.10.0
libtpu: 0.0.40
codegen_flags: <defaults>
</compile_context>

<pallas_src>
import functools

import jax
import jax.numpy as jnp
from jax import lax
from jax.experimental import pallas as pl
from jax.experimental.pallas import tpu as pltpu

BN_EPS = 1e-5
DROPOUT_RATE = 0.1

# Cached capability flag for the hardware-PRNG dropout path.
_HW_PRNG_OK = [True]


# --------------------------------------------------------------------------
# Dropout mask helpers
# --------------------------------------------------------------------------
def _hash_keep(flat_u32, seed_u32, threshold_u32):
    """2-round stateless mix: keep element iff hash >= p * 2^32 (fallback path)."""
    h = flat_u32 * jnp.uint32(0x9E3779B1) + (seed_u32 ^ jnp.uint32(0x85EBCA6B))
    h = h ^ (h >> 13)
    h = h * jnp.uint32(0xC2B2AE35)
    h = h ^ (h >> 16)
    return h >= threshold_u32


def _keep_mask(shape, seed_i32, step_i32, threshold, use_hw_prng, flat_index_fn):
    """Boolean keep-mask of `shape`. HW PRNG by default; hash fallback otherwise."""
    if use_hw_prng:
        pltpu.prng_seed(seed_i32 + step_i32)         # per-tile stream
        bits = pltpu.prng_random_bits(shape)
        if bits.dtype != jnp.dtype(jnp.uint32):
            bits = pltpu.bitcast(bits, jnp.uint32)
        return bits >= jnp.uint32(threshold)
    flat = flat_index_fn().astype(jnp.uint32)
    return _hash_keep(flat, seed_i32.astype(jnp.uint32), jnp.uint32(threshold))


# --------------------------------------------------------------------------
# Kernels
# --------------------------------------------------------------------------
def _fused_kernel(seed_ref, x_ref, gamma_ref, beta_ref, o_ref, *,
                  count, inv_keep, threshold, use_hw_prng, apply_dropout):
    """Whole activation resident in VMEM: stats + BN + dropout + ReLU in one body."""
    x = x_ref[...].astype(jnp.float32)                 # (N, C, HW)
    s = jnp.sum(x, axis=2, keepdims=True)              # (N, C, 1) lane reduce
    ss = jnp.sum(x * x, axis=2, keepdims=True)
    ch_sum = jnp.sum(s, axis=0)                        # (C, 1)
    ch_sumsq = jnp.sum(ss, axis=0)

    inv_n = jnp.float32(1.0 / count)
    mean = ch_sum * inv_n
    var = jnp.maximum(ch_sumsq * inv_n - mean * mean, 0.0)   # biased (training BN)
    a = gamma_ref[...] * lax.rsqrt(var + jnp.float32(BN_EPS))
    scale = a * jnp.float32(inv_keep)
    bias = (beta_ref[...] - a * mean) * jnp.float32(inv_keep)

    y = x * scale + bias                               # (C,1) broadcasts over (N,C,HW)

    if apply_dropout:
        C, HW = x.shape[1], x.shape[2]

        def flat_fn():
            n_ids = lax.broadcasted_iota(jnp.int32, x.shape, 0)
            c_ids = lax.broadcasted_iota(jnp.int32, x.shape, 1)
            hw_ids = lax.broadcasted_iota(jnp.int32, x.shape, 2)
            return (n_ids * jnp.int32(C) + c_ids) * jnp.int32(HW) + hw_ids

        keep = _keep_mask(x.shape, seed_ref[0], jnp.int32(0), threshold,
                          use_hw_prng, flat_fn)
        y = jnp.where(keep, y, jnp.float32(0.0))

    o_ref[...] = jnp.maximum(y, jnp.float32(0.0)).astype(o_ref.dtype)


def _stats_kernel(x_ref, sum_ref, sumsq_ref):
    """Per-row (n,c) partial sum / sumsq, accumulated across the HW grid axis."""
    @pl.when(pl.program_id(1) == 0)
    def _init():
        sum_ref[...] = jnp.zeros_like(sum_ref)
        sumsq_ref[...] = jnp.zeros_like(sumsq_ref)

    x = x_ref[...].astype(jnp.float32)                 # (r_blk, hw_blk)
    sum_ref[...] += jnp.sum(x, axis=1, keepdims=True)
    sumsq_ref[...] += jnp.sum(x * x, axis=1, keepdims=True)


def _apply_kernel(seed_ref, x_ref, scale_ref, bias_ref, o_ref, *,
                  hw_total, r_blk, hw_blk, threshold, use_hw_prng, apply_dropout):
    """out = relu(dropout(x * scale + bias)); BN + keep-scale folded into scale/bias."""
    x = x_ref[...].astype(jnp.float32)                 # (r_blk, hw_blk)
    y = x * scale_ref[...] + bias_ref[...]             # per-row FMA

    if apply_dropout:
        ri = pl.program_id(0)
        li = pl.program_id(1)
        step = ri * pl.num_programs(1) + li

        def flat_fn():
            base = ri * jnp.int32(r_blk * hw_total) + li * jnp.int32(hw_blk)
            rows = lax.broadcasted_iota(jnp.int32, y.shape, 0)
            cols = lax.broadcasted_iota(jnp.int32, y.shape, 1)
            return rows * jnp.int32(hw_total) + cols + base

        keep = _keep_mask(y.shape, seed_ref[0], step, threshold,
                          use_hw_prng, flat_fn)
        y = jnp.where(keep, y, jnp.float32(0.0))

    o_ref[...] = jnp.maximum(y, jnp.float32(0.0)).astype(o_ref.dtype)


# --------------------------------------------------------------------------
# Tiling / VMEM budgeting
# --------------------------------------------------------------------------
def _vmem_caps():
    """(physical_vmem, per-block byte budget, fast-path array byte budget)."""
    try:
        cap = int(pltpu.get_tpu_info().vmem_capacity_bytes)
    except Exception:
        cap = 64 << 20                       # conservative (v7x-like) fallback
    if cap >= (100 << 20):                   # v5e / v6e: 128 MiB physical VMEM
        return cap, 12 << 20, 16 << 20
    return cap, 5 << 20, 8 << 20             # v7x-class: 64 MiB per TensorCore


def _vmem_limit(cap, needed_bytes):
    return int(min(int(cap * 0.85), max(32 << 20, needed_bytes)))


def _largest_divisor_multiple(dim, quantum, cap):
    """Largest d with d | dim, d % quantum == 0, d <= cap (None if none)."""
    best = None
    d = quantum
    top = min(dim, cap)
    while d <= top:
        if dim % d == 0:
            best = d
        d += quantum
    return best


def _choose_blocks(R, HW, block_bytes):
    """Lane-dense (r_blk, hw_blk) tiles for the 2-D (N*C, H*W) layout."""
    budget = max(8 * 128, block_bytes // 4)
    if HW % 128 == 0:
        hw_blk = _largest_divisor_multiple(HW, 128, max(128, budget // 8)) or HW
    else:
        hw_blk = HW                          # full dim is always a legal block
    if R % 8 == 0:
        r_blk = _largest_divisor_multiple(R, 8, max(8, budget // hw_blk)) or R
    else:
        r_blk = R
    return r_blk, hw_blk


# --------------------------------------------------------------------------
# Forward
# --------------------------------------------------------------------------
def _adn_forward_impl(x_nchw, gamma, beta, seed, *, dropout_rate, r_block,
                      hw_block, force_two_pass, use_hw_prng):
    N, C, H, W = x_nchw.shape
    HW = H * W
    R = N * C
    count = N * HW
    apply_dropout = dropout_rate > 0.0
    inv_keep = 1.0 / (1.0 - dropout_rate) if apply_dropout else 1.0
    threshold = int(round(dropout_rate * (1 << 32))) if apply_dropout else 0

    cap, block_bytes, fast_bytes = _vmem_caps()
    seed_arr = jnp.asarray([seed], dtype=jnp.int32)
    smem_spec = pl.BlockSpec(memory_space=pltpu.MemorySpace.SMEM)
    x_bytes = N * C * HW * x_nchw.dtype.itemsize

    # ---- Fast path: whole activation comfortably fits in VMEM -> single fused
    # kernel, one HBM read + one write.
    if (not force_two_pass) and x_bytes <= fast_bytes:
        x3 = x_nchw.reshape(N, C, HW)                      # free contiguous reshape
        gamma_c1 = gamma.reshape(C, 1).astype(jnp.float32)
        beta_c1 = beta.reshape(C, 1).astype(jnp.float32)
        out3 = pl.pallas_call(
            functools.partial(_fused_kernel, count=count, inv_keep=inv_keep,
                              threshold=threshold, use_hw_prng=use_hw_prng,
                              apply_dropout=apply_dropout),
            out_shape=jax.ShapeDtypeStruct((N, C, HW), x_nchw.dtype),
            grid=(1,),
            in_specs=[smem_spec,
                      pl.BlockSpec((N, C, HW), lambda i: (0, 0, 0)),
                      pl.BlockSpec((C, 1), lambda i: (0, 0)),
                      pl.BlockSpec((C, 1), lambda i: (0, 0))],
            out_specs=pl.BlockSpec((N, C, HW), lambda i: (0, 0, 0)),
            compiler_params=pltpu.CompilerParams(
                dimension_semantics=("arbitrary",),
                vmem_limit_bytes=_vmem_limit(cap, 4 * x_bytes + (8 << 20))),
        )(seed_arr, x3, gamma_c1, beta_c1)
        return out3.reshape(N, C, H, W)

    # ---- General two-pass tiled path. Rows = N*C (sublane axis), lanes = H*W.
    x2 = x_nchw.reshape(R, HW)                             # free contiguous reshape
    auto_r, auto_hw = _choose_blocks(R, HW, block_bytes)
    r_blk = r_block if r_block is not None else auto_r
    hw_blk = hw_block if hw_block is not None else auto_hw
    assert R % r_blk == 0 and HW % hw_blk == 0
    grid = (R // r_blk, HW // hw_blk)
    blk_bytes = r_blk * hw_blk * 4

    x_spec = pl.BlockSpec((r_blk, hw_blk), lambda ri, li: (ri, li))
    row_spec = pl.BlockSpec((r_blk, 1), lambda ri, li: (ri, 0))

    # Pass 1: per-row partial sums. Row axis "parallel" (megacore on v7x),
    # HW axis is the sequential reduction, accumulated into the resident
    # output block.
    row_sum, row_sumsq = pl.pallas_call(
        _stats_kernel,
        out_shape=(jax.ShapeDtypeStruct((R, 1), jnp.float32),
                   jax.ShapeDtypeStruct((R, 1), jnp.float32)),
        grid=grid,
        in_specs=[x_spec],
        out_specs=(row_spec, row_spec),
        compiler_params=pltpu.CompilerParams(
            dimension_semantics=("parallel", "arbitrary"),
            vmem_limit_bytes=_vmem_limit(cap, 2 * blk_bytes + (8 << 20))),
    )(x2)

    # Tiny O(C) finalize in plain JAX: batch stats -> fused scale/bias with the
    # inverted-dropout keep-scale folded in, then per-row (n,c) vectors.
    ch_sum = jnp.sum(row_sum.reshape(N, C), axis=0)
    ch_sumsq = jnp.sum(row_sumsq.reshape(N, C), axis=0)
    mean = ch_sum / count
    var = jnp.maximum(ch_sumsq / count - mean * mean, 0.0)  # biased (training BN)
    a = gamma.astype(jnp.float32) * lax.rsqrt(var + BN_EPS)
    scale_c = a * inv_keep
    bias_c = (beta.astype(jnp.float32) - a * mean) * inv_keep
    scale_r = jnp.tile(scale_c, N).reshape(R, 1)            # row r -> channel r % C
    bias_r = jnp.tile(bias_c, N).reshape(R, 1)

    # Pass 2: apply scale/bias, dropout mask, ReLU. Both grid axes parallel.
    out2 = pl.pallas_call(
        functools.partial(_apply_kernel, hw_total=HW, r_blk=r_blk, hw_blk=hw_blk,
                          threshold=threshold, use_hw_prng=use_hw_prng,
                          apply_dropout=apply_dropout),
        out_shape=jax.ShapeDtypeStruct((R, HW), x_nchw.dtype),
        grid=grid,
        in_specs=[smem_spec, x_spec, row_spec, row_spec],
        out_specs=x_spec,
        compiler_params=pltpu.CompilerParams(
            dimension_semantics=("parallel", "parallel"),
            vmem_limit_bytes=_vmem_limit(cap, 4 * blk_bytes + (8 << 20))),
    )(seed_arr, x2, scale_r, bias_r)

    return out2.reshape(N, C, H, W)


def adn_forward(x_nchw, gamma, beta, seed, *, dropout_rate=DROPOUT_RATE,
                r_block=None, hw_block=None, force_two_pass=False,
                use_hw_prng=None):
    """ADN('NDA'): BatchNorm2d (batch stats) -> Dropout(p) -> ReLU. NCHW in/out."""
    if use_hw_prng is None:
        use_hw_prng = _HW_PRNG_OK[0]
    try:
        return _adn_forward_impl(x_nchw, gamma, beta, seed,
                                 dropout_rate=dropout_rate, r_block=r_block,
                                 hw_block=hw_block, force_two_pass=force_two_pass,
                                 use_hw_prng=use_hw_prng)
    except Exception:
        if use_hw_prng and dropout_rate > 0.0:
            # HW PRNG not available in this environment: fall back to the
            # stateless hash mask (same semantics, more VALU work).
            _HW_PRNG_OK[0] = False
            return _adn_forward_impl(x_nchw, gamma, beta, seed,
                                     dropout_rate=dropout_rate, r_block=r_block,
                                     hw_block=hw_block,
                                     force_two_pass=force_two_pass,
                                     use_hw_prng=False)
        raise


# --------------------------------------------------------------------------
# Self-test
# --------------------------------------------------------------------------
if __name__ == "__main__":
    key = jax.random.PRNGKey(0)
    kx, kg, kb, kx2, kg2, kb2 = jax.random.split(key, 6)

    def reference_bn_relu(x, gamma, beta):
        N, C, H, W = x.shape
        xf = x.reshape(N, C, H * W).astype(jnp.float32)
        mean = jnp.mean(xf, axis=(0, 2), keepdims=True)
        var = jnp.mean(xf * xf, axis=(0, 2), keepdims=True) - mean * mean
        y = (xf - mean) * lax.rsqrt(var + BN_EPS) * gamma.reshape(1, C, 1) \
            + beta.reshape(1, C, 1)
        return jnp.maximum(y, 0.0).reshape(x.shape)

    def check_case(x, gamma, beta, seed, **kw):
        ref = reference_bn_relu(x, gamma, beta)
        # (a) exact check with dropout disabled (BN + ReLU only).
        out_nd = adn_forward(x, gamma, beta, seed, dropout_rate=0.0, **kw)
        jax.block_until_ready(out_nd)
        err_nd = float(jnp.max(jnp.abs(out_nd - ref)))
        assert jnp.allclose(out_nd, ref.astype(x.dtype), atol=1e-3, rtol=1e-3), err_nd
        # (b) with dropout: each element is 0 or the scaled kept BN+ReLU value.
        out = adn_forward(x, gamma, beta, seed, dropout_rate=DROPOUT_RATE, **kw)
        jax.block_until_ready(out)
        kept_val = ref / (1.0 - DROPOUT_RATE)
        err = jnp.minimum(jnp.abs(out), jnp.abs(out - kept_val))
        assert float(jnp.max(err)) < 1e-3, float(jnp.max(err))
        # (c) empirical drop fraction ~ dropout rate (on clearly positive values).
        pos = ref > 1e-3
        dropped = jnp.logical_and(pos, out <= 1e-6)
        frac = float(jnp.sum(dropped)) / max(1, int(jnp.sum(pos)))
        assert abs(frac - DROPOUT_RATE) < 0.08, frac

    # Small shape from the module spec (exercises the fused single-pass path).
    N, C, H, W = 2, 4, 16, 16
    x = jax.random.normal(kx, (N, C, H, W), dtype=jnp.float32) + 0.3
    gamma = 1.0 + 0.1 * jax.random.normal(kg, (C,), dtype=jnp.float32)
    beta = 0.1 * jax.random.normal(kb, (C,), dtype=jnp.float32)
    check_case(x, gamma, beta, seed=42)

    # Slightly larger case forced onto the tiled two-pass path with a real
    # (4 x 2) grid so the partial-sum accumulation and parallel axes are hit.
    N2, C2, H2, W2 = 4, 8, 16, 16
    x2 = jax.random.normal(kx2, (N2, C2, H2, W2), dtype=jnp.float32) - 0.2
    gamma2 = 1.0 + 0.1 * jax.random.normal(kg2, (C2,), dtype=jnp.float32)
    beta2 = 0.1 * jax.random.normal(kb2, (C2,), dtype=jnp.float32)
    check_case(x2, gamma2, beta2, seed=7, force_two_pass=True,
               r_block=8, hw_block=128)

    print("KERNEL_OK")
</pallas_src>

<mosaic_0001>
module attributes {stable_mosaic.version = 11 : i64} {
  func.func @_fused_kernel(%arg0: i32, %arg1: memref<1xi32, #tpu.memory_space<smem>>, %arg2: memref<2x4x256xf32, #tpu.memory_space<vmem>>, %arg3: memref<4x1xf32, #tpu.memory_space<vmem>>, %arg4: memref<4x1xf32, #tpu.memory_space<vmem>>, %arg5: memref<2x4x256xf32, #tpu.memory_space<vmem>>) attributes {dimension_semantics = [#tpu.dimension_semantics<arbitrary>], iteration_bounds = array<i64: 1>, scalar_prefetch = 0 : i64, scratch_operands = 0 : i64, tpu.core_type = #tpu.core_type<tc>, window_params = [{transform_indices = @transform_0, window_bounds = array<i64: 1>}, {pipeline_mode = #tpu.pipeline_mode<synchronous>, transform_indices = @transform_1, window_bounds = array<i64: 2, 4, 256>}, {pipeline_mode = #tpu.pipeline_mode<synchronous>, transform_indices = @transform_2, window_bounds = array<i64: 4, 1>}, {pipeline_mode = #tpu.pipeline_mode<synchronous>, transform_indices = @transform_3, window_bounds = array<i64: 4, 1>}, {pipeline_mode = #tpu.pipeline_mode<synchronous>, transform_indices = @transform_4, window_bounds = array<i64: 2, 4, 256>}]} {
    %c0 = arith.constant 0 : index
    %c0_0 = arith.constant 0 : index
    %c0_1 = arith.constant 0 : index
    %0 = vector.load %arg2[%c0, %c0_0, %c0_1] : memref<2x4x256xf32, #tpu.memory_space<vmem>>, vector<2x4x256xf32>
    %cst = arith.constant dense<0.000000e+00> : vector<2x4xf32>
    %1 = vector.multi_reduction <add>, %0, %cst [2] : vector<2x4x256xf32> to vector<2x4xf32>
    %2 = vector.shape_cast %1 : vector<2x4xf32> to vector<2x4x1xf32>
    %3 = arith.mulf %0, %0 : vector<2x4x256xf32>
    %cst_2 = arith.constant dense<0.000000e+00> : vector<2x4xf32>
    %4 = vector.multi_reduction <add>, %3, %cst_2 [2] : vector<2x4x256xf32> to vector<2x4xf32>
    %5 = vector.shape_cast %4 : vector<2x4xf32> to vector<2x4x1xf32>
    %cst_3 = arith.constant dense<0.000000e+00> : vector<4x1xf32>
    %6 = vector.multi_reduction <add>, %2, %cst_3 [0] : vector<2x4x1xf32> to vector<4x1xf32>
    %cst_4 = arith.constant dense<0.000000e+00> : vector<4x1xf32>
    %7 = vector.multi_reduction <add>, %5, %cst_4 [0] : vector<2x4x1xf32> to vector<4x1xf32>
    %cst_5 = arith.constant 0.001953125 : f32
    %8 = vector.broadcast %cst_5 : f32 to vector<4x1xf32>
    %9 = arith.mulf %6, %8 : vector<4x1xf32>
    %cst_6 = arith.constant 0.001953125 : f32
    %10 = vector.broadcast %cst_6 : f32 to vector<4x1xf32>
    %11 = arith.mulf %7, %10 : vector<4x1xf32>
    %12 = arith.mulf %9, %9 : vector<4x1xf32>
    %13 = arith.subf %11, %12 : vector<4x1xf32>
    %cst_7 = arith.constant 0.000000e+00 : f32
    %14 = vector.broadcast %cst_7 : f32 to vector<4x1xf32>
    %15 = arith.maximumf %13, %14 : vector<4x1xf32>
    %c0_8 = arith.constant 0 : index
    %c0_9 = arith.constant 0 : index
    %16 = vector.load %arg3[%c0_8, %c0_9] : memref<4x1xf32, #tpu.memory_space<vmem>>, vector<4x1xf32>
    %cst_10 = arith.constant 9.99999974E-6 : f32
    %17 = vector.broadcast %cst_10 : f32 to vector<4x1xf32>
    %18 = arith.addf %15, %17 : vector<4x1xf32>
    %19 = math.rsqrt %18 : vector<4x1xf32>
    %20 = arith.mulf %16, %19 : vector<4x1xf32>
    %cst_11 = arith.constant 1.000000e+00 : f32
    %21 = vector.broadcast %cst_11 : f32 to vector<4x1xf32>
    %22 = arith.mulf %20, %21 : vector<4x1xf32>
    %c0_12 = arith.constant 0 : index
    %c0_13 = arith.constant 0 : index
    %23 = vector.load %arg4[%c0_12, %c0_13] : memref<4x1xf32, #tpu.memory_space<vmem>>, vector<4x1xf32>
    %24 = arith.mulf %20, %9 : vector<4x1xf32>
    %25 = arith.subf %23, %24 : vector<4x1xf32>
    %cst_14 = arith.constant 1.000000e+00 : f32
    %26 = vector.broadcast %cst_14 : f32 to vector<4x1xf32>
    %27 = arith.mulf %25, %26 : vector<4x1xf32>
    %28 = vector.shape_cast %22 : vector<4x1xf32> to vector<1x4x1xf32>
    %29 = vector.broadcast %28 : vector<1x4x1xf32> to vector<2x4x256xf32>
    %30 = arith.mulf %0, %29 : vector<2x4x256xf32>
    %31 = vector.shape_cast %27 : vector<4x1xf32> to vector<1x4x1xf32>
    %32 = vector.broadcast %31 : vector<1x4x1xf32> to vector<2x4x256xf32>
    %33 = arith.addf %30, %32 : vector<2x4x256xf32>
    %cst_15 = arith.constant 0.000000e+00 : f32
    %34 = vector.broadcast %cst_15 : f32 to vector<2x4x256xf32>
    %35 = arith.maximumf %33, %34 : vector<2x4x256xf32>
    %c0_16 = arith.constant 0 : index
    %c0_17 = arith.constant 0 : index
    %c0_18 = arith.constant 0 : index
    %36 = vector.load %arg5[%c0_16, %c0_17, %c0_18] : memref<2x4x256xf32, #tpu.memory_space<vmem>>, vector<2x4x256xf32>
    tpu.vector_store %arg5[%c0_16, %c0_17, %c0_18], %35 {strides = array<i32>} : memref<2x4x256xf32, #tpu.memory_space<vmem>>, vector<2x4x256xf32>,
    return
  }
  func.func @transform_0(%arg0: i32) -> i32 {
    %c0_i32 = arith.constant 0 : i32
    %c0_i32_0 = arith.constant 0 : i32
    return %c0_i32 : i32
  }
  func.func @transform_1(%arg0: i32) -> (i32, i32, i32) {
    %c0_i32 = arith.constant 0 : i32
    %c0_i32_0 = arith.constant 0 : i32
    %c0_i32_1 = arith.constant 0 : i32
    %c0_i32_2 = arith.constant 0 : i32
    return %c0_i32, %c0_i32_0, %c0_i32_1 : i32, i32, i32
  }
  func.func @transform_2(%arg0: i32) -> (i32, i32) {
    %c0_i32 = arith.constant 0 : i32
    %c0_i32_0 = arith.constant 0 : i32
    %c0_i32_1 = arith.constant 0 : i32
    return %c0_i32, %c0_i32_0 : i32, i32
  }
  func.func @transform_3(%arg0: i32) -> (i32, i32) {
    %c0_i32 = arith.constant 0 : i32
    %c0_i32_0 = arith.constant 0 : i32
    %c0_i32_1 = arith.constant 0 : i32
    return %c0_i32, %c0_i32_0 : i32, i32
  }
  func.func @transform_4(%arg0: i32) -> (i32, i32, i32) {
    %c0_i32 = arith.constant 0 : i32
    %c0_i32_0 = arith.constant 0 : i32
    %c0_i32_1 = arith.constant 0 : i32
    %c0_i32_2 = arith.constant 0 : i32
    return %c0_i32, %c0_i32_0, %c0_i32_1 : i32, i32, i32
  }
}

</mosaic_0001>

<llo_original>
// kernel: tpu_custom_call.1
$region0: #{tpu_custom_call.1}
  #allocation0 [shape = 'u32[]', space=smem, size = 0x4, offset = 0x4, fixed_abs, tag = 'smem constant byte address 0x4 - core index']
  #allocation1 [shape = 'u32[72,128]{1,0:T(1,128)}', space=vmem, size = 0x9000, scoped, tag = 'internal scratch']
  #allocation2 [shape = 's32[1]{0:T(128)S(6)}', space=smem, size = 0x200, scoped, tag = 'scoped memory for tpu_custom_call.1']
  %s0 = inlined_call_operand.<no memory space> [shape: s32[1], index: 0, kind: input, shape index: {}]
  %s1 = inlined_call_operand.hbm [shape: f32[2,4,256], index: 1, kind: input, shape index: {}]
  %s2 = inlined_call_operand.vmem [shape: f32[4,1], index: 2, kind: input, shape index: {}]
  %s3 = inlined_call_operand.vmem [shape: f32[4,1], index: 3, kind: input, shape index: {}]
  %s4 = inlined_call_operand.hbm [shape: f32[2,4,256], index: 4, kind: output, shape index: {}]
  %s5 = sld [smem:[#allocation0]]
  $region30: #{tpu_custom_call.1} parent=0
    _
  %s7 = ssub.s32 1, %s5
  %s8 = scalar_select 0, %s7, %s5
  %9 = sst [smem:[#allocation2]] %s0
  $region1: #{tpu_custom_call.1} parent=0
    #allocation3 [shape = 'u8[8192]{0}', space=vmem, size = 0x2000, scoped, tag = 'input window, operand 1, single buffered']
    #allocation4 [shape = 's32[1]{0}', space=sflag, size = 0x4, scoped, tag = 'scoped memory for tpu_custom_call.1']
    #allocation5 [shape = 's32[1]{0}', space=sflag, size = 0x4, scoped, tag = 'scoped memory for tpu_custom_call.1']
    #allocation6 [shape = 'u8[8192]{0}', space=vmem, size = 0x2000, scoped, tag = 'output window, operand 0, single buffered']
    %10 = vsyncpa [#allocation4], 0
    %11 = vsyncpa [#allocation5], 0
    // Predicated region
    $region2: #{tpu_custom_call.1} parent=1 // pred_check
      _
    $region3: #{tpu_custom_call.1} parent=1 // pred_check_branch
      %13 = sbr.rel (0) target = $region5
    $region4: #{tpu_custom_call.1} parent=1 // pred_region
      _
    $region5: #{tpu_custom_call.1} parent=1 // pred_fallthru
      _
    // Predicated region
    $region6: #{tpu_custom_call.1} parent=1 // pred_check
      _
    $region7: #{tpu_custom_call.1} parent=1 // pred_check_branch
      %15 = sbr.rel (0) target = $region9
    $region8: #{tpu_custom_call.1} parent=1 // pred_region
      %17 = vsyncadd [#allocation4], 0
      %s18 = sshll.u32 %s1, 4
      %s19 = int_to_ptr.hbm [resolvable:$true] %s18
      %s20 = sshll.u32 [#allocation3], 4
      %s21 = int_to_ptr.vmem [resolvable:$true] %s20
      %26 = dma.hbm_to_vmem [thread:$0]  %s19, 256, %s21, [#allocation4], 128, 128, 8
    $region9: #{tpu_custom_call.1} parent=1 // pred_fallthru
      _
    // Predicated region
    $region10: #{tpu_custom_call.1} parent=1 // pred_check
      _
    $region11: #{tpu_custom_call.1} parent=1 // pred_check_branch
      %28 = sbr.rel (0) target = $region13
    $region12: #{tpu_custom_call.1} parent=1 // pred_region
      _
    $region13: #{tpu_custom_call.1} parent=1 // pred_fallthru
      _
    // Predicated region
    $region14: #{tpu_custom_call.1} parent=1 // pred_check
      _
    $region15: #{tpu_custom_call.1} parent=1 // pred_check_branch
      %30 = sbr.rel (0) target = $region17
    $region16: #{tpu_custom_call.1} parent=1 // pred_region
      _
    $region17: #{tpu_custom_call.1} parent=1 // pred_fallthru
      _
    // Predicated region
    $region18: #{tpu_custom_call.1} parent=1 // pred_check
      _
    $region19: #{tpu_custom_call.1} parent=1 // pred_check_branch
      %32 = sbr.rel (0) target = $region21
    $region20: #{tpu_custom_call.1} parent=1 // pred_region
      %34 = dma.done [#allocation4], 256
    $region21: #{tpu_custom_call.1} parent=1 // pred_fallthru
      _
    %v35 = vld [vmem:[#allocation3] sm:$0xff]
    %v36 = vld [vmem:[#allocation3 + $0x8] sm:$0xff]
    %39 = vst [vmem:[#allocation1] ss:$2 sm:$0xff] %v35
    %v40 = vld.sshfl [vmem:[#allocation1] sm:$0xff pattern:$0x75316420]
    %v41 = vld.sshfl [vmem:[#allocation1 + $0x8] sm:$0xff pattern:$0x75316420]
    %s42 = scalar_lea.vmem [#allocation1], 16
    %43 = vst [vmem:[%s42] ss:$2 sm:$0xff] %v36
    %v44 = vld.sshfl [vmem:[#allocation1 + $0x10] sm:$0xff pattern:$0x75316420]
    %v45 = vld.sshfl [vmem:[#allocation1 + $0x18] sm:$0xff pattern:$0x75316420]
    %vm50 = vcmask 1043456
    %v51 = vsel %vm50, %v40, 0.0
    %v52 = vsel %vm50, %v41, 0.0
    %v53 = vadd.f32 %v51, %v52
    %54 = vadd.xlane.f32.xlu0 %v53
    %v55 = vpop.xlane.xlu0 %54
    %v56 = vsel %vm50, %v44, 0.0
    %v57 = vsel %vm50, %v45, 0.0
    %v58 = vadd.f32 %v56, %v57
    %59 = vadd.xlane.f32.xlu0 %v58
    %v60 = vpop.xlane.xlu0 %59
    %v61 = vmul.f32 %v35, %v35
    %v62 = vmul.f32 %v36, %v36
    %65 = vst [vmem:[#allocation1] ss:$2 sm:$0xff] %v61
    %v66 = vld.sshfl [vmem:[#allocation1] sm:$0xff pattern:$0x75316420]
    %v67 = vld.sshfl [vmem:[#allocation1 + $0x8] sm:$0xff pattern:$0x75316420]
    %s68 = scalar_lea.vmem [#allocation1], 16
    %69 = vst [vmem:[%s68] ss:$2 sm:$0xff] %v62
    %v70 = vld.sshfl [vmem:[#allocation1 + $0x10] sm:$0xff pattern:$0x75316420]
    %v71 = vld.sshfl [vmem:[#allocation1 + $0x18] sm:$0xff pattern:$0x75316420]
    %v76 = vsel %vm50, %v66, 0.0
    %v77 = vsel %vm50, %v67, 0.0
    %v78 = vadd.f32 %v76, %v77
    %79 = vadd.xlane.f32.xlu0 %v78
    %v80 = vpop.xlane.xlu0 %79
    %v81 = vsel %vm50, %v70, 0.0
    %v82 = vsel %vm50, %v71, 0.0
    %v83 = vadd.f32 %v81, %v82
    %84 = vadd.xlane.f32.xlu0 %v83
    %v85 = vpop.xlane.xlu0 %84
    %v86 = vsel %vm50, %v55, 0.0
    %v87 = vsel %vm50, %v60, 0.0
    %v88 = vadd.f32 %v86, %v87
    %v89 = vsel %vm50, %v80, 0.0
    %v90 = vsel %vm50, %v85, 0.0
    %v91 = vadd.f32 %v89, %v90
    %v92 = vmul.f32 %v88, 0.001953125
    %v93 = vmul.f32 %v91, 0.001953125
    %v94 = vmul.f32 %v92, %v92
    %v95 = vsub.f32 %v93, %v94
    %v96 = vmax.f32 %v95, 0.0
    %v97 = vld [vmem:[%s2] sm:$0xf]
    %v98 = vadd.f32 %v96, 1e-05
    %v99 = vrsqrt.pop %v98
    %v100 = vmul.f32 %v99, %v98
    %v101 = vmul.f32 %v100, %v99
    %v102 = vmul.f32 0.5, %v101
    %v103 = vsub.f32 1.5, %v102
    %v104 = vmul.f32 %v99, %v103
    %vm105 = vweird.f32 %v98
    %vm106 = vweird.f32 %v99
    %vm107 = vmor %vm105, %vm106
    %v108 = vsel %vm107, %v99, %v104
    %v109 = vmul.f32 %v97, %v108
    %v110 = vld [vmem:[%s3] sm:$0xf]
    %v111 = vmul.f32 %v109, %v92
    %v112 = vsub.f32 %v110, %v111
    %114 = vset.pattern.permute.xlu0 0
    %115 = vperm.xlu0 %114, %v109
    %v116 = vpop.permute.xlu0 %115
    %v118 = vunpack.c.l.s4 839922192
    %v119 = vunpack.c.0.s8 %v118
    %v120 = vperm.slane %v116, %v119
    %v122 = vmul.f32 %v35, %v120
    %v123 = vmul.f32 %v36, %v120
    %125 = vset.pattern.permute.xlu0 0
    %126 = vperm.xlu0 %125, %v112
    %v127 = vpop.permute.xlu0 %126
    %v129 = vunpack.c.l.s4 839922192
    %v130 = vunpack.c.0.s8 %v129
    %v131 = vperm.slane %v127, %v130
    %v133 = vadd.f32 %v122, %v131
    %v134 = vadd.f32 %v123, %v131
    %v135 = vmax.f32 %v133, 0.0
    %v136 = vmax.f32 %v134, 0.0
    %137 = vst [vmem:[#allocation6] sm:$0xff] %v135
    %138 = vst [vmem:[#allocation6 + $0x8] sm:$0xff] %v136
    // Predicated region
    $region22: #{tpu_custom_call.1} parent=1 // pred_check
      _
    $region23: #{tpu_custom_call.1} parent=1 // pred_check_branch
      %140 = sbr.rel (0) target = $region25
    $region24: #{tpu_custom_call.1} parent=1 // pred_region
      %142 = vsyncadd [#allocation5], 0
      %s143 = sshll.u32 [#allocation6], 4
      %s144 = int_to_ptr.vmem [resolvable:$true] %s143
      %s145 = sshll.u32 %s4, 4
      %s146 = int_to_ptr.hbm [resolvable:$true] %s145
      %151 = dma.vmem_to_hbm [thread:$0]  %s144, 256, %s146, [#allocation5], 128, 128, 8
    $region25: #{tpu_custom_call.1} parent=1 // pred_fallthru
      _
    // Predicated region
    $region26: #{tpu_custom_call.1} parent=1 // pred_check
      _
    $region27: #{tpu_custom_call.1} parent=1 // pred_check_branch
      %153 = sbr.rel (0) target = $region29
    $region28: #{tpu_custom_call.1} parent=1 // pred_region
      %155 = dma.done [#allocation5], 256
    $region29: #{tpu_custom_call.1} parent=1 // pred_fallthru
      _
    %156 = vsyncpa [#allocation4], 1
    %157 = vsyncpa [#allocation5], 1

</llo_original>
